<compile_context>
chip_gen: v6e
topology: v6e:2x2x1
jax: 0.10.0
libtpu: 0.0.40
codegen_flags: <defaults>
</compile_context>

<pallas_src>
import functools

import jax
import jax.numpy as jnp
import numpy as np
from jax import lax
from jax.experimental import pallas as pl
from jax.experimental.pallas import tpu as pltpu


def _act_kernel(xproj_ref, wflag_ref, whh_ref, wp_ref, bp_ref, ah_init_ref,
                allhx_ref, pcost_ref, times_ref,
                *, max_ponder, epsilon):
    T, B, Hp = allhx_ref.shape

    w_flag = wflag_ref[...]                               # (1, Hp)
    whh = whh_ref[...]                                    # (Hp, Hp)  W_hh^T
    wp_b = jnp.broadcast_to(wp_ref[...], (B, Hp))         # hoisted broadcast
    bp = bp_ref[...]                                      # (1, 1)
    ah_init = ah_init_ref[...]                            # (B, 1): 0 real, 2 pad

    one_minus_eps = jnp.float32(1.0 - epsilon)
    ones_b1 = jnp.ones((B, 1), jnp.float32)

    def cell_and_gate(xp, hx):
        # b_ih + b_hh are already folded into xp by the wrapper.
        hx_new = jnp.tanh(xp + jnp.dot(hx, whh,
                                       preferred_element_type=jnp.float32))
        h = jax.nn.sigmoid(
            jnp.sum(hx_new * wp_b, axis=-1, keepdims=True) + bp)      # (B, 1)
        return hx_new, h

    def time_step(t, carry):
        hx_prev, pcost = carry
        x_proj0 = xproj_ref[t]                 # flag column = 0 (first step)
        x_proj1 = x_proj0 + w_flag             # flag column = 1 (later steps)

        # ---- peeled ponder step 0: every row active ----
        sp_cost = -ah_init                     # step_ponder_cost = -accum_h(pre)
        hx, h = cell_and_gate(x_proj0, hx_prev)
        accum_h = ah_init + h
        p = h - jnp.maximum(accum_h - 1.0, 0.0)
        accum_hx = (1.0 + p) * hx              # += hx ; += p*hx  (fused)
        step_count = ones_b1

        def substep(state, step_valid=None):
            hx, accum_hx, accum_h, step_count, sp_cost = state
            sel = accum_h < one_minus_eps                            # (B, 1)
            active = sel if step_valid is None else jnp.logical_and(sel,
                                                                    step_valid)
            sp_cost = jnp.where(active, -accum_h, sp_cost)
            hx, h = cell_and_gate(x_proj1, hx)   # inactive rows never observed
            accum_h_new = accum_h + h
            p = h - jnp.maximum(accum_h_new - 1.0, 0.0)
            coeff = jnp.where(active, 1.0 + p, 0.0)
            accum_hx = accum_hx + coeff * hx
            accum_h = jnp.where(active, accum_h_new, accum_h)
            step_count = step_count + jnp.where(active, 1.0, 0.0)
            return (hx, accum_hx, accum_h, step_count, sp_cost)

        def cond_fn(c):
            return jnp.logical_and(c[0] < max_ponder, c[1] < one_minus_eps)

        def body_fn(c):
            s = c[0]
            state = substep(c[2:])                          # ponder step s
            state = substep(state, s + 1 < max_ponder)      # ponder step s + 1
            return (s + 2, jnp.min(state[2]), *state)       # state[2] = accum_h

        init = (jnp.int32(1), jnp.min(accum_h),
                hx, accum_hx, accum_h, step_count, sp_cost)
        final = lax.while_loop(cond_fn, body_fn, init)
        accum_hx, step_count, sp_cost = final[3], final[5], final[6]

        # Every row runs >= 1 ponder step, so step_count >= 1 (no div-by-zero).
        hx_out = accum_hx / step_count
        allhx_ref[t] = hx_out
        times_ref[t] = step_count
        return hx_out, pcost + sp_cost

    hx0 = jnp.zeros((B, Hp), jnp.float32)        # hx=None path: zero init
    pc0 = jnp.zeros((B, 1), jnp.float32)
    _, pcost = lax.fori_loop(0, T, time_step, (hx0, pc0))
    pcost_ref[...] = pcost


def act_from_cell(x, params, *, max_ponder=100, epsilon=0.01):
    """x: (T, B, D) float32 (time-major, batch_first=False).

    Matches the PyTorch ACTFromCell forward for a tanh
    nn.RNNCell(input_size=D+1, hidden_size=H) with hx=None."""
    x = jnp.asarray(x, jnp.float32)
    T, B, D = x.shape
    H = params["whh"].shape[0]

    Hp = ((H + 127) // 128) * 128      # lane-dense hidden
    Bp = ((B + 7) // 8) * 8            # sublane-dense batch

    wih = jnp.asarray(params["wih"], jnp.float32)          # (H, D+1)
    wih_in = wih[:, :D].T                                  # (D, H)
    w_flag = wih[:, D].reshape(1, H)                       # (1, H) flag column
    bih = jnp.asarray(params["bih"], jnp.float32).reshape(1, H)
    bhh = jnp.asarray(params["bhh"], jnp.float32).reshape(1, H)
    whh = jnp.asarray(params["whh"], jnp.float32).T        # (H, H)
    wp = jnp.asarray(params["wp"], jnp.float32).reshape(1, H)
    bp = jnp.asarray(params["bp"], jnp.float32).reshape(1, 1)

    # Hoisted input projection: one (T*B, D) x (D, H) XLA matmul, biases folded.
    x_proj = jnp.einsum("tbd,dh->tbh", x, wih_in,
                        preferred_element_type=jnp.float32) + (bih + bhh)

    # Zero-pad: padded hidden columns stay exactly 0 through the recurrence.
    x_proj_p = jnp.pad(x_proj, ((0, 0), (0, Bp - B), (0, Hp - H)))
    w_flag_p = jnp.pad(w_flag, ((0, 0), (0, Hp - H)))
    wp_p = jnp.pad(wp, ((0, 0), (0, Hp - H)))
    whh_p = jnp.pad(whh, ((0, Hp - H), (0, Hp - H)))
    # accum_h init: 0 for real rows, 2 (>= 1-eps) for padded rows so they can
    # never keep the halting while_loop alive.
    ah_init = jnp.where(jnp.arange(Bp)[:, None] < B, 0.0, 2.0).astype(jnp.float32)

    kernel = functools.partial(_act_kernel, max_ponder=max_ponder,
                               epsilon=epsilon)

    def vmem():
        return pl.BlockSpec(memory_space=pltpu.MemorySpace.VMEM)

    # Resident-bytes estimate (f32, (*,1) buffers pad to 128 lanes).
    resident = 4 * (2 * T * Bp * Hp + 2 * T * Bp * 128 + Hp * Hp
                    + 4 * Hp + 4 * Bp * 128)
    vmem_limit = int(min(64 * 2**20, max(16 * 2**20, 2 * resident + (1 << 20))))

    all_hx_p, pcost_p, times_p = pl.pallas_call(
        kernel,
        out_shape=(jax.ShapeDtypeStruct((T, Bp, Hp), jnp.float32),  # all_hx
                   jax.ShapeDtypeStruct((Bp, 1), jnp.float32),      # ponder_cost
                   jax.ShapeDtypeStruct((T, Bp, 1), jnp.float32)),  # step counts
        in_specs=[vmem() for _ in range(6)],
        out_specs=(vmem(), vmem(), vmem()),
        compiler_params=pltpu.CompilerParams(vmem_limit_bytes=vmem_limit),
    )(x_proj_p, w_flag_p, whh_p, wp_p, bp, ah_init)

    all_hx = all_hx_p[:, :B, :H]                   # strip padding
    hx_final = all_hx[-1:]                         # (1, B, H) == hx.unsqueeze(0)
    pcost = pcost_p[:B, 0]                         # (B,)
    # Single device->host transfer for all ponder_times.
    times = np.asarray(jax.device_get(times_p[:, :B, 0]))          # (T, B)
    info = {
        "ponder_cost": pcost,
        "ponder_times": [times[i] for i in range(T)],
    }
    return all_hx, hx_final, info


def _init_params(key, input_dim, hidden):
    """Deterministic init matching torch RNNCell / Linear shapes.
    rnn_cell = nn.RNNCell(input_dim + 1, hidden, nonlinearity='tanh')
    ponder_linear = nn.Linear(hidden, 1) with bias filled to 1."""
    k1, k2, k3, k4, k5 = jax.random.split(key, 5)
    s = 1.0 / jnp.sqrt(hidden)
    return {
        "wih": jax.random.uniform(k1, (hidden, input_dim + 1), jnp.float32, -s, s),
        "bih": jax.random.uniform(k2, (hidden,), jnp.float32, -s, s),
        "whh": jax.random.uniform(k3, (hidden, hidden), jnp.float32, -s, s),
        "bhh": jax.random.uniform(k4, (hidden,), jnp.float32, -s, s),
        "wp": jax.random.uniform(k5, (1, hidden), jnp.float32, -s, s),
        "bp": jnp.ones((1,), jnp.float32),
    }


if __name__ == "__main__":
    T, B, D, H = 8, 8, 4, 32      # seq, batch, input_dim, hidden
    key = jax.random.PRNGKey(0)
    kx, kp = jax.random.split(key)
    x = jax.random.normal(kx, (T, B, D), dtype=jnp.float32)
    params = _init_params(kp, D, H)

    all_hx, hx, info = act_from_cell(x, params, max_ponder=100, epsilon=0.01)
    jax.block_until_ready(all_hx)
    jax.block_until_ready(hx)
    jax.block_until_ready(info["ponder_cost"])

    assert all_hx.shape == (T, B, H)
    assert hx.shape == (1, B, H)
    assert info["ponder_cost"].shape == (B,)
    assert len(info["ponder_times"]) == T
    assert bool(jnp.all(jnp.isfinite(all_hx)))
    assert bool(jnp.all(jnp.isfinite(info["ponder_cost"])))
    assert all(float(t.min()) >= 1.0 for t in info["ponder_times"])
    assert all(float(t.max()) <= 100.0 for t in info["ponder_times"])
    print("KERNEL_OK")
</pallas_src>

<mosaic_0001>
module attributes {stable_mosaic.version = 11 : i64} {
  func.func @_act_kernel(%arg0: memref<8x8x128xf32, #tpu.memory_space<vmem>>, %arg1: memref<1x128xf32, #tpu.memory_space<vmem>>, %arg2: memref<128x128xf32, #tpu.memory_space<vmem>>, %arg3: memref<1x128xf32, #tpu.memory_space<vmem>>, %arg4: memref<1x1xf32, #tpu.memory_space<vmem>>, %arg5: memref<8x1xf32, #tpu.memory_space<vmem>>, %arg6: memref<8x8x128xf32, #tpu.memory_space<vmem>>, %arg7: memref<8x1xf32, #tpu.memory_space<vmem>>, %arg8: memref<8x8x1xf32, #tpu.memory_space<vmem>>) attributes {dimension_semantics = [], scalar_prefetch = 0 : i64, scratch_operands = 0 : i64, tpu.core_type = #tpu.core_type<tc>} {
    %c0 = arith.constant 0 : index
    %c0_0 = arith.constant 0 : index
    %0 = vector.load %arg1[%c0, %c0_0] : memref<1x128xf32, #tpu.memory_space<vmem>>, vector<1x128xf32>
    %c0_1 = arith.constant 0 : index
    %c0_2 = arith.constant 0 : index
    %1 = vector.load %arg2[%c0_1, %c0_2] : memref<128x128xf32, #tpu.memory_space<vmem>>, vector<128x128xf32>
    %c0_3 = arith.constant 0 : index
    %c0_4 = arith.constant 0 : index
    %2 = vector.load %arg3[%c0_3, %c0_4] : memref<1x128xf32, #tpu.memory_space<vmem>>, vector<1x128xf32>
    %3 = vector.shape_cast %2 : vector<1x128xf32> to vector<1x128xf32>
    %4 = vector.broadcast %3 : vector<1x128xf32> to vector<8x128xf32>
    %c0_5 = arith.constant 0 : index
    %c0_6 = arith.constant 0 : index
    %5 = vector.load %arg4[%c0_5, %c0_6] : memref<1x1xf32, #tpu.memory_space<vmem>>, vector<1x1xf32>
    %c0_7 = arith.constant 0 : index
    %c0_8 = arith.constant 0 : index
    %6 = vector.load %arg5[%c0_7, %c0_8] : memref<8x1xf32, #tpu.memory_space<vmem>>, vector<8x1xf32>
    %cst = arith.constant 1.000000e+00 : f32
    %7 = vector.broadcast %cst : f32 to vector<8x1xf32>
    %cst_9 = arith.constant 0.000000e+00 : f32
    %8 = vector.broadcast %cst_9 : f32 to vector<8x128xf32>
    %cst_10 = arith.constant 0.000000e+00 : f32
    %9 = vector.broadcast %cst_10 : f32 to vector<8x1xf32>
    %cst_11 = arith.constant 9.900000e-01 : f32
    %c0_i32 = arith.constant 0 : i32
    %c8_i32 = arith.constant 8 : i32
    %10 = arith.addi %c0_i32, %c8_i32 : i32
    %c1_i32 = arith.constant 1 : i32
    %11:2 = scf.for %arg9 = %c0_i32 to %10 step %c1_i32 iter_args(%arg10 = %8, %arg11 = %9) -> (vector<8x128xf32>, vector<8x1xf32>)  : i32 {
      %13 = arith.index_cast %arg9 : i32 to index
      %c0_15 = arith.constant 0 : index
      %c0_16 = arith.constant 0 : index
      %14 = vector.load %arg0[%13, %c0_15, %c0_16] : memref<8x8x128xf32, #tpu.memory_space<vmem>>, vector<1x8x128xf32>
      %15 = vector.shape_cast %14 : vector<1x8x128xf32> to vector<8x128xf32>
      %16 = vector.broadcast %0 : vector<1x128xf32> to vector<8x128xf32>
      %17 = arith.addf %15, %16 : vector<8x128xf32>
      %cst_17 = arith.constant 0.000000e+00 : f32
      %18 = vector.broadcast %cst_17 : f32 to vector<8x1xf32>
      %19 = arith.subf %18, %6 : vector<8x1xf32>
      %cst_18 = arith.constant dense<0.000000e+00> : vector<8x128xf32>
      %20 = tpu.matmul %arg10, %1, %cst_18 {dimension_numbers = #tpu.dot_dimension_numbers<[1], [0], [0], [1], [0, 0, 1, 1], [], []>} : vector<8x128xf32>, vector<128x128xf32>, vector<8x128xf32> -> vector<8x128xf32>
      %21 = arith.addf %15, %20 : vector<8x128xf32>
      %22 = math.tanh %21 : vector<8x128xf32>
      %23 = arith.mulf %22, %4 : vector<8x128xf32>
      %cst_19 = arith.constant dense<0.000000e+00> : vector<8xf32>
      %24 = vector.multi_reduction <add>, %23, %cst_19 [1] : vector<8x128xf32> to vector<8xf32>
      %25 = vector.shape_cast %24 : vector<8xf32> to vector<8x1xf32>
      %26 = vector.broadcast %5 : vector<1x1xf32> to vector<8x1xf32>
      %27 = arith.addf %25, %26 : vector<8x1xf32>
      %28 = arith.negf %27 : vector<8x1xf32>
      %29 = math.exp %28 : vector<8x1xf32>
      %cst_20 = arith.constant 1.000000e+00 : f32
      %30 = vector.broadcast %cst_20 : f32 to vector<8x1xf32>
      %31 = arith.addf %30, %29 : vector<8x1xf32>
      %32 = arith.divf %30, %31 : vector<8x1xf32>
      %33 = arith.addf %6, %32 : vector<8x1xf32>
      %cst_21 = arith.constant 1.000000e+00 : f32
      %34 = vector.broadcast %cst_21 : f32 to vector<8x1xf32>
      %35 = arith.subf %33, %34 : vector<8x1xf32>
      %cst_22 = arith.constant 0.000000e+00 : f32
      %36 = vector.broadcast %cst_22 : f32 to vector<8x1xf32>
      %37 = arith.maximumf %35, %36 : vector<8x1xf32>
      %38 = arith.subf %32, %37 : vector<8x1xf32>
      %cst_23 = arith.constant 1.000000e+00 : f32
      %39 = vector.broadcast %cst_23 : f32 to vector<8x1xf32>
      %40 = arith.addf %39, %38 : vector<8x1xf32>
      %41 = vector.broadcast %40 : vector<8x1xf32> to vector<8x128xf32>
      %42 = arith.mulf %41, %22 : vector<8x128xf32>
      %43 = vector.shape_cast %33 : vector<8x1xf32> to vector<1x8x1xf32>
      %cst_24 = arith.constant dense<0x7F800000> : vector<1xf32>
      %44 = vector.multi_reduction <minimumf>, %43, %cst_24 [1, 2] : vector<1x8x1xf32> to vector<1xf32>
      %45 = vector.shape_cast %44 : vector<1xf32> to vector<1x1x1xf32>
      %46 = vector.extract %45[0, 0, 0] : f32 from vector<1x1x1xf32>
      %c1_i32_25 = arith.constant 1 : i32
      %47:7 = scf.while (%arg12 = %c1_i32_25, %arg13 = %46, %arg14 = %22, %arg15 = %42, %arg16 = %33, %arg17 = %7, %arg18 = %19) : (i32, f32, vector<8x128xf32>, vector<8x128xf32>, vector<8x1xf32>, vector<8x1xf32>, vector<8x1xf32>) -> (i32, f32, vector<8x128xf32>, vector<8x128xf32>, vector<8x1xf32>, vector<8x1xf32>, vector<8x1xf32>) {
        %c100_i32 = arith.constant 100 : i32
        %59 = arith.cmpi slt, %arg12, %c100_i32 : i32
        %60 = arith.cmpf olt, %arg13, %cst_11 : f32
        %61 = arith.andi %59, %60 : i1
        scf.condition(%61) %arg12, %arg13, %arg14, %arg15, %arg16, %arg17, %arg18 : i32, f32, vector<8x128xf32>, vector<8x128xf32>, vector<8x1xf32>, vector<8x1xf32>, vector<8x1xf32>
      } do {
      ^bb0(%arg12: i32, %arg13: f32, %arg14: vector<8x128xf32>, %arg15: vector<8x128xf32>, %arg16: vector<8x1xf32>, %arg17: vector<8x1xf32>, %arg18: vector<8x1xf32>):
        %59 = vector.broadcast %cst_11 : f32 to vector<8x1xf32>
        %60 = arith.cmpf olt, %arg16, %59 : vector<8x1xf32>
        %cst_30 = arith.constant 0.000000e+00 : f32
        %61 = vector.broadcast %cst_30 : f32 to vector<8x1xf32>
        %62 = arith.subf %61, %arg16 : vector<8x1xf32>
        %63 = arith.select %60, %62, %arg18 : vector<8x1xi1>, vector<8x1xf32>
        %cst_31 = arith.constant dense<0.000000e+00> : vector<8x128xf32>
        %64 = tpu.matmul %arg14, %1, %cst_31 {dimension_numbers = #tpu.dot_dimension_numbers<[1], [0], [0], [1], [0, 0, 1, 1], [], []>} : vector<8x128xf32>, vector<128x128xf32>, vector<8x128xf32> -> vector<8x128xf32>
        %65 = arith.addf %17, %64 : vector<8x128xf32>
        %66 = math.tanh %65 : vector<8x128xf32>
        %67 = arith.mulf %66, %4 : vector<8x128xf32>
        %cst_32 = arith.constant dense<0.000000e+00> : vector<8xf32>
        %68 = vector.multi_reduction <add>, %67, %cst_32 [1] : vector<8x128xf32> to vector<8xf32>
        %69 = vector.shape_cast %68 : vector<8xf32> to vector<8x1xf32>
        %70 = vector.broadcast %5 : vector<1x1xf32> to vector<8x1xf32>
        %71 = arith.addf %69, %70 : vector<8x1xf32>
        %72 = arith.negf %71 : vector<8x1xf32>
        %73 = math.exp %72 : vector<8x1xf32>
        %cst_33 = arith.constant 1.000000e+00 : f32
        %74 = vector.broadcast %cst_33 : f32 to vector<8x1xf32>
        %75 = arith.addf %74, %73 : vector<8x1xf32>
        %76 = arith.divf %74, %75 : vector<8x1xf32>
        %77 = arith.addf %arg16, %76 : vector<8x1xf32>
        %cst_34 = arith.constant 1.000000e+00 : f32
        %78 = vector.broadcast %cst_34 : f32 to vector<8x1xf32>
        %79 = arith.subf %77, %78 : vector<8x1xf32>
        %cst_35 = arith.constant 0.000000e+00 : f32
        %80 = vector.broadcast %cst_35 : f32 to vector<8x1xf32>
        %81 = arith.maximumf %79, %80 : vector<8x1xf32>
        %82 = arith.subf %76, %81 : vector<8x1xf32>
        %cst_36 = arith.constant 1.000000e+00 : f32
        %83 = vector.broadcast %cst_36 : f32 to vector<8x1xf32>
        %84 = arith.addf %83, %82 : vector<8x1xf32>
        %cst_37 = arith.constant 0.000000e+00 : f32
        %85 = vector.broadcast %cst_37 : f32 to vector<8x1xf32>
        %86 = arith.select %60, %84, %85 : vector<8x1xi1>, vector<8x1xf32>
        %87 = vector.broadcast %86 : vector<8x1xf32> to vector<8x128xf32>
        %88 = arith.mulf %87, %66 : vector<8x128xf32>
        %89 = arith.addf %arg15, %88 : vector<8x128xf32>
        %90 = arith.select %60, %77, %arg16 : vector<8x1xi1>, vector<8x1xf32>
        %cst_38 = arith.constant 1.000000e+00 : f32
        %cst_39 = arith.constant 0.000000e+00 : f32
        %91 = vector.broadcast %cst_38 : f32 to vector<8x1xf32>
        %92 = vector.broadcast %cst_39 : f32 to vector<8x1xf32>
        %93 = arith.select %60, %91, %92 : vector<8x1xi1>, vector<8x1xf32>
        %94 = arith.addf %arg17, %93 : vector<8x1xf32>
        %c1_i32_40 = arith.constant 1 : i32
        %95 = arith.addi %arg12, %c1_i32_40 : i32
        %c100_i32 = arith.constant 100 : i32
        %96 = arith.cmpi slt, %95, %c100_i32 : i32
        %97 = vector.broadcast %cst_11 : f32 to vector<8x1xf32>
        %98 = arith.cmpf olt, %90, %97 : vector<8x1xf32>
        %99 = vector.broadcast %96 : i1 to vector<8x1xi1>
        %100 = arith.andi %98, %99 : vector<8x1xi1>
        %cst_41 = arith.constant 0.000000e+00 : f32
        %101 = vector.broadcast %cst_41 : f32 to vector<8x1xf32>
        %102 = arith.subf %101, %90 : vector<8x1xf32>
        %103 = arith.select %100, %102, %63 : vector<8x1xi1>, vector<8x1xf32>
        %cst_42 = arith.constant dense<0.000000e+00> : vector<8x128xf32>
        %104 = tpu.matmul %66, %1, %cst_42 {dimension_numbers = #tpu.dot_dimension_numbers<[1], [0], [0], [1], [0, 0, 1, 1], [], []>} : vector<8x128xf32>, vector<128x128xf32>, vector<8x128xf32> -> vector<8x128xf32>
        %105 = arith.addf %17, %104 : vector<8x128xf32>
        %106 = math.tanh %105 : vector<8x128xf32>
        %107 = arith.mulf %106, %4 : vector<8x128xf32>
        %cst_43 = arith.constant dense<0.000000e+00> : vector<8xf32>
        %108 = vector.multi_reduction <add>, %107, %cst_43 [1] : vector<8x128xf32> to vector<8xf32>
        %109 = vector.shape_cast %108 : vector<8xf32> to vector<8x1xf32>
        %110 = vector.broadcast %5 : vector<1x1xf32> to vector<8x1xf32>
        %111 = arith.addf %109, %110 : vector<8x1xf32>
        %112 = arith.negf %111 : vector<8x1xf32>
        %113 = math.exp %112 : vector<8x1xf32>
        %cst_44 = arith.constant 1.000000e+00 : f32
        %114 = vector.broadcast %cst_44 : f32 to vector<8x1xf32>
        %115 = arith.addf %114, %113 : vector<8x1xf32>
        %116 = arith.divf %114, %115 : vector<8x1xf32>
        %117 = arith.addf %90, %116 : vector<8x1xf32>
        %cst_45 = arith.constant 1.000000e+00 : f32
        %118 = vector.broadcast %cst_45 : f32 to vector<8x1xf32>
        %119 = arith.subf %117, %118 : vector<8x1xf32>
        %cst_46 = arith.constant 0.000000e+00 : f32
        %120 = vector.broadcast %cst_46 : f32 to vector<8x1xf32>
        %121 = arith.maximumf %119, %120 : vector<8x1xf32>
        %122 = arith.subf %116, %121 : vector<8x1xf32>
        %cst_47 = arith.constant 1.000000e+00 : f32
        %123 = vector.broadcast %cst_47 : f32 to vector<8x1xf32>
        %124 = arith.addf %123, %122 : vector<8x1xf32>
        %cst_48 = arith.constant 0.000000e+00 : f32
        %125 = vector.broadcast %cst_48 : f32 to vector<8x1xf32>
        %126 = arith.select %100, %124, %125 : vector<8x1xi1>, vector<8x1xf32>
        %127 = vector.broadcast %126 : vector<8x1xf32> to vector<8x128xf32>
        %128 = arith.mulf %127, %106 : vector<8x128xf32>
        %129 = arith.addf %89, %128 : vector<8x128xf32>
        %130 = arith.select %100, %117, %90 : vector<8x1xi1>, vector<8x1xf32>
        %cst_49 = arith.constant 1.000000e+00 : f32
        %cst_50 = arith.constant 0.000000e+00 : f32
        %131 = vector.broadcast %cst_49 : f32 to vector<8x1xf32>
        %132 = vector.broadcast %cst_50 : f32 to vector<8x1xf32>
        %133 = arith.select %100, %131, %132 : vector<8x1xi1>, vector<8x1xf32>
        %134 = arith.addf %94, %133 : vector<8x1xf32>
        %c2_i32 = arith.constant 2 : i32
        %135 = arith.addi %arg12, %c2_i32 : i32
        %136 = vector.shape_cast %130 : vector<8x1xf32> to vector<1x8x1xf32>
        %cst_51 = arith.constant dense<0x7F800000> : vector<1xf32>
        %137 = vector.multi_reduction <minimumf>, %136, %cst_51 [1, 2] : vector<1x8x1xf32> to vector<1xf32>
        %138 = vector.shape_cast %137 : vector<1xf32> to vector<1x1x1xf32>
        %139 = vector.extract %138[0, 0, 0] : f32 from vector<1x1x1xf32>
        scf.yield %135, %139, %106, %129, %130, %134, %103 : i32, f32, vector<8x128xf32>, vector<8x128xf32>, vector<8x1xf32>, vector<8x1xf32>, vector<8x1xf32>
      }
      %48 = vector.broadcast %47#5 : vector<8x1xf32> to vector<8x128xf32>
      %49 = arith.divf %47#3, %48 : vector<8x128xf32>
      %50 = arith.index_cast %arg9 : i32 to index
      %c0_26 = arith.constant 0 : index
      %c0_27 = arith.constant 0 : index
      %51 = vector.load %arg6[%50, %c0_26, %c0_27] : memref<8x8x128xf32, #tpu.memory_space<vmem>>, vector<1x8x128xf32>
      %52 = vector.shape_cast %51 : vector<1x8x128xf32> to vector<8x128xf32>
      %53 = vector.shape_cast %49 : vector<8x128xf32> to vector<1x8x128xf32>
      tpu.vector_store %arg6[%50, %c0_26, %c0_27], %53 {strides = array<i32>} : memref<8x8x128xf32, #tpu.memory_space<vmem>>, vector<1x8x128xf32>,
      %54 = arith.index_cast %arg9 : i32 to index
      %c0_28 = arith.constant 0 : index
      %c0_29 = arith.constant 0 : index
      %55 = vector.load %arg8[%54, %c0_28, %c0_29] : memref<8x8x1xf32, #tpu.memory_space<vmem>>, vector<1x8x1xf32>
      %56 = vector.shape_cast %55 : vector<1x8x1xf32> to vector<8x1xf32>
      %57 = vector.shape_cast %47#5 : vector<8x1xf32> to vector<1x8x1xf32>
      tpu.vector_store %arg8[%54, %c0_28, %c0_29], %57 {strides = array<i32>} : memref<8x8x1xf32, #tpu.memory_space<vmem>>, vector<1x8x1xf32>,
      %58 = arith.addf %arg11, %47#6 : vector<8x1xf32>
      scf.yield %49, %58 : vector<8x128xf32>, vector<8x1xf32>
    }
    %c8_i32_12 = arith.constant 8 : i32
    %c0_13 = arith.constant 0 : index
    %c0_14 = arith.constant 0 : index
    %12 = vector.load %arg7[%c0_13, %c0_14] : memref<8x1xf32, #tpu.memory_space<vmem>>, vector<8x1xf32>
    tpu.vector_store %arg7[%c0_13, %c0_14], %11#1 {strides = array<i32>} : memref<8x1xf32, #tpu.memory_space<vmem>>, vector<8x1xf32>,
    return
  }
}

</mosaic_0001>

<llo_original>
// kernel: tpu_custom_call.1
$region0: #{tpu_custom_call.1}
  #allocation0 [shape = 'u32[]', space=smem, size = 0x4, offset = 0x4, fixed_abs, tag = 'smem constant byte address 0x4 - core index']
  #allocation1 [shape = 'u32[144,128]{1,0:T(1,128)}', space=vmem, size = 0x12000, scoped, tag = 'internal scratch']
  #allocation2 [shape = 'f32[1,1]{1,0:T(1,128)S(1)}', space=vmem, size = 0x200, scoped, tag = 'scoped memory for tpu_custom_call.1']
  %s0 = inlined_call_operand.hbm [shape: f32[8,8,128], index: 0, kind: input, shape index: {}]
  %s1 = inlined_call_operand.vmem [shape: f32[1,128], index: 1, kind: input, shape index: {}]
  %s2 = inlined_call_operand.hbm [shape: f32[128,128], index: 2, kind: input, shape index: {}]
  %s3 = inlined_call_operand.vmem [shape: f32[1,128], index: 3, kind: input, shape index: {}]
  %s4 = inlined_call_operand.<no memory space> [shape: f32[1,1], index: 4, kind: input, shape index: {}]
  %s5 = inlined_call_operand.vmem [shape: f32[8,1], index: 5, kind: input, shape index: {}]
  %s6 = inlined_call_operand.hbm [shape: f32[8,8,128], index: 6, kind: output, shape index: {0}]
  %s7 = inlined_call_operand.vmem [shape: f32[8,1], index: 7, kind: output, shape index: {1}]
  %s8 = inlined_call_operand.vmem [shape: f32[8,8,1], index: 8, kind: output, shape index: {2}]
  %9 = xla_tuple %s6, %s7, %s8
  %s10 = sld [smem:[#allocation0]]
  $region72: #{tpu_custom_call.1} parent=0
    _
  %s12 = ssub.s32 1, %s10
  %s13 = scalar_select 0, %s12, %s10
  %v14 = vstv %s4
  %15 = vst [vmem:[#allocation2] sm:$0x1] %v14
  $region1: #{tpu_custom_call.1} parent=0
    #allocation3 [shape = 'u8[32768]{0}', space=vmem, size = 0x8000, scoped, tag = 'input window, operand 0, single buffered']
    #allocation4 [shape = 's32[1]{0}', space=sflag, size = 0x4, scoped, tag = 'scoped memory for tpu_custom_call.1']
    #allocation5 [shape = 's32[1]{0}', space=sflag, size = 0x4, scoped, tag = 'scoped memory for tpu_custom_call.1']
    #allocation6 [shape = 'u8[65536]{0}', space=vmem, size = 0x10000, scoped, tag = 'input window, operand 2, single buffered']
    #allocation7 [shape = 's32[1]{0}', space=sflag, size = 0x4, scoped, tag = 'scoped memory for tpu_custom_call.1']
    #allocation8 [shape = 'u8[32768]{0}', space=vmem, size = 0x8000, scoped, tag = 'output window, operand 0, single buffered']
    %16 = vsyncpa [#allocation4], 0
    %17 = vsyncpa [#allocation7], 0
    %18 = vsyncpa [#allocation5], 0
    // Predicated region
    $region2: #{tpu_custom_call.1} parent=1 // pred_check
      _
    $region3: #{tpu_custom_call.1} parent=1 // pred_check_branch
      %20 = sbr.rel (0) target = $region5
    $region4: #{tpu_custom_call.1} parent=1 // pred_region
      %s22 = ssub.s32 1024, 1024
      %23 = vsyncadd [#allocation4], %s22
      %s24 = sshll.u32 [#allocation3], 4
      %s25 = int_to_ptr.vmem [resolvable:$true] %s24
      %30 = dma.hbm_to_vmem [thread:$0]  %s0, 1024, %s25, [#allocation4], 128, 128, 8
    $region5: #{tpu_custom_call.1} parent=1 // pred_fallthru
      _
    // Predicated region
    $region6: #{tpu_custom_call.1} parent=1 // pred_check
      _
    $region7: #{tpu_custom_call.1} parent=1 // pred_check_branch
      %32 = sbr.rel (0) target = $region9
    $region8: #{tpu_custom_call.1} parent=1 // pred_region
      _
    $region9: #{tpu_custom_call.1} parent=1 // pred_fallthru
      _
    // Predicated region
    $region10: #{tpu_custom_call.1} parent=1 // pred_check
      _
    $region11: #{tpu_custom_call.1} parent=1 // pred_check_branch
      %34 = sbr.rel (0) target = $region13
    $region12: #{tpu_custom_call.1} parent=1 // pred_region
      %s36 = ssub.s32 2048, 2048
      %37 = vsyncadd [#allocation7], %s36
      %s38 = sshll.u32 [#allocation6], 4
      %s39 = int_to_ptr.vmem [resolvable:$true] %s38
      %44 = dma.hbm_to_vmem [thread:$0]  %s2, 2048, %s39, [#allocation7], 128, 128, 8
    $region13: #{tpu_custom_call.1} parent=1 // pred_fallthru
      _
    // Predicated region
    $region14: #{tpu_custom_call.1} parent=1 // pred_check
      _
    $region15: #{tpu_custom_call.1} parent=1 // pred_check_branch
      %46 = sbr.rel (0) target = $region17
    $region16: #{tpu_custom_call.1} parent=1 // pred_region
      _
    $region17: #{tpu_custom_call.1} parent=1 // pred_fallthru
      _
    // Predicated region
    $region18: #{tpu_custom_call.1} parent=1 // pred_check
      _
    $region19: #{tpu_custom_call.1} parent=1 // pred_check_branch
      %48 = sbr.rel (0) target = $region21
    $region20: #{tpu_custom_call.1} parent=1 // pred_region
      _
    $region21: #{tpu_custom_call.1} parent=1 // pred_fallthru
      _
    // Predicated region
    $region22: #{tpu_custom_call.1} parent=1 // pred_check
      _
    $region23: #{tpu_custom_call.1} parent=1 // pred_check_branch
      %50 = sbr.rel (0) target = $region25
    $region24: #{tpu_custom_call.1} parent=1 // pred_region
      _
    $region25: #{tpu_custom_call.1} parent=1 // pred_fallthru
      _
    // Predicated region
    $region26: #{tpu_custom_call.1} parent=1 // pred_check
      _
    $region27: #{tpu_custom_call.1} parent=1 // pred_check_branch
      %52 = sbr.rel (0) target = $region29
    $region28: #{tpu_custom_call.1} parent=1 // pred_region
      %53 = dma.done [#allocation4], 1024
    $region29: #{tpu_custom_call.1} parent=1 // pred_fallthru
      _
    // Predicated region
    $region30: #{tpu_custom_call.1} parent=1 // pred_check
      _
    $region31: #{tpu_custom_call.1} parent=1 // pred_check_branch
      %55 = sbr.rel (0) target = $region33
    $region32: #{tpu_custom_call.1} parent=1 // pred_region
      %56 = dma.done [#allocation7], 2048
    $region33: #{tpu_custom_call.1} parent=1 // pred_fallthru
      _
    %v57 = vld [vmem:[%s1] sm:$0x1]
    %v58 = vld [vmem:[#allocation6] sm:$0xff]
    %v59 = vld [vmem:[#allocation6 + $0x8] sm:$0xff]
    %v60 = vld [vmem:[#allocation6 + $0x10] sm:$0xff]
    %v61 = vld [vmem:[#allocation6 + $0x18] sm:$0xff]
    %v62 = vld [vmem:[#allocation6 + $0x20] sm:$0xff]
    %v63 = vld [vmem:[#allocation6 + $0x28] sm:$0xff]
    %v64 = vld [vmem:[#allocation6 + $0x30] sm:$0xff]
    %v65 = vld [vmem:[#allocation6 + $0x38] sm:$0xff]
    %v66 = vld [vmem:[#allocation6 + $0x40] sm:$0xff]
    %v67 = vld [vmem:[#allocation6 + $0x48] sm:$0xff]
    %v68 = vld [vmem:[#allocation6 + $0x50] sm:$0xff]
    %v69 = vld [vmem:[#allocation6 + $0x58] sm:$0xff]
    %v70 = vld [vmem:[#allocation6 + $0x60] sm:$0xff]
    %v71 = vld [vmem:[#allocation6 + $0x68] sm:$0xff]
    %v72 = vld [vmem:[#allocation6 + $0x70] sm:$0xff]
    %v73 = vld [vmem:[#allocation6 + $0x78] sm:$0xff]
    %v74 = vld [vmem:[%s3] sm:$0x1]
    %v76 = vlaneseq
    %v77 = vshrl.u32 %v76, 7
    %v78 = vsub.s32 0, %v77
    %v79 = vrot.slane %v74, %v78
    %v81 = vld [vmem:[#allocation2] sm:$0x1]
    %v82 = vld [vmem:[%s5] sm:$0xff]
    loop: start=0, step=1, limit=8
    $region34: #{tpu_custom_call.1} parent=1 // loop_pre_header
      _
    $region35: #{tpu_custom_call.1} parent=1 // loop_header
      %s84 = sphi 0, %s88
      %p85 = scmp.ge.s32.totalorder %s84, 8
      %v89 = vphi 0.0, %v451
      %v90 = vphi 0.0, %v456
    $region36: #{tpu_custom_call.1} parent=1 // loop_header_branch
      %87 = sbr.rel (%p85) target = $region40
    $region37: #{tpu_custom_call.1} parent=1 // loop_body
      %s91 = smul.u32 %s84, 8
      %s92 = scalar_lea.vmem [#allocation3], %s91
      %v93 = vld [vmem:[%s92] sm:$0xff]
      %v95 = vlaneseq
      %v96 = vshrl.u32 %v95, 7
      %v97 = vsub.s32 0, %v96
      %v98 = vrot.slane %v57, %v97
      %v100 = vadd.f32 %v93, %v98
      %v101 = vsub.f32 0.0, %v82
      %102 = vmatprep.subr.mxu0 0.0
      %103 = vmatpush1.msra.mxu0 %v73
      %104 = vmatprep.subr.mxu0 0.0
      %105 = vmatpush1.msra.mxu0 %v72
      %106 = vmatprep.subr.mxu0 0.0
      %107 = vmatpush1.msra.mxu0 %v71
      %108 = vmatprep.subr.mxu0 0.0
      %109 = vmatpush1.msra.mxu0 %v70
      %110 = vmatprep.subr.mxu0 0.0
      %111 = vmatpush1.msra.mxu0 %v69
      %112 = vmatprep.subr.mxu0 0.0
      %113 = vmatpush1.msra.mxu0 %v68
      %114 = vmatprep.subr.mxu0 0.0
      %115 = vmatpush1.msra.mxu0 %v67
      %116 = vmatprep.subr.mxu0 0.0
      %117 = vmatpush1.msra.mxu0 %v66
      %118 = vmatprep.subr.mxu0 0.0
      %119 = vmatpush1.msra.mxu0 %v65
      %120 = vmatprep.subr.mxu0 0.0
      %121 = vmatpush1.msra.mxu0 %v64
      %122 = vmatprep.subr.mxu0 0.0
      %123 = vmatpush1.msra.mxu0 %v63
      %124 = vmatprep.subr.mxu0 0.0
      %125 = vmatpush1.msra.mxu0 %v62
      %126 = vmatprep.subr.mxu0 0.0
      %127 = vmatpush1.msra.mxu0 %v61
      %128 = vmatprep.subr.mxu0 0.0
      %129 = vmatpush1.msra.mxu0 %v60
      %130 = vmatprep.subr.mxu0 0.0
      %131 = vmatpush1.msra.mxu0 %v59
      %132 = vmatprep.subr.mxu0 0.0
      %133 = vmatpush1.msra.mxu0 %v58
      %134 = vmatprep.subr.mxu0 0.0
      %135 = vmatpush2.msra.mxu0 0.0
      %136 = vmatprep.subr.mxu0 0.0
      %137 = vmatpush2.msra.mxu0 0.0
      %138 = vmatprep.subr.mxu0 0.0
      %139 = vmatpush2.msra.mxu0 0.0
      %140 = vmatprep.subr.mxu0 0.0
      %141 = vmatpush2.msra.mxu0 0.0
      %142 = vmatprep.subr.mxu0 0.0
      %143 = vmatpush2.msra.mxu0 0.0
      %144 = vmatprep.subr.mxu0 0.0
      %145 = vmatpush2.msra.mxu0 0.0
      %146 = vmatprep.subr.mxu0 0.0
      %147 = vmatpush2.msra.mxu0 0.0
      %148 = vmatprep.subr.mxu0 0.0
      %149 = vmatpush2.msra.mxu0 0.0
      %150 = vmatprep.subr.mxu0 0.0
      %151 = vmatpush2.msra.mxu0 0.0
      %152 = vmatprep.subr.mxu0 0.0
      %153 = vmatpush2.msra.mxu0 0.0
      %154 = vmatprep.subr.mxu0 0.0
      %155 = vmatpush2.msra.mxu0 0.0
      %156 = vmatprep.subr.mxu0 0.0
      %157 = vmatpush2.msra.mxu0 0.0
      %158 = vmatprep.subr.mxu0 0.0
      %159 = vmatpush2.msra.mxu0 0.0
      %160 = vmatprep.subr.mxu0 0.0
      %161 = vmatpush2.msra.mxu0 0.0
      %162 = vmatprep.subr.mxu0 0.0
      %163 = vmatpush2.msra.mxu0 0.0
      %164 = vmatprep.subr.mxu0 0.0
      %165 = vmatpush2.msra.mxu0 0.0
      %166 = vmatprep.mubr.f32.mxu0 0.0
      %167 = vmatmul.mubr.f32.gmra.mxu0 %v89
      %v168 = vpop.f32.mrf.mxu0
      %v169 = vadd.f32 0.0, %v168
      %v170 = vpop.f32.mrf.mxu0
      %171 = vdwg.mxu0
      %v172 = vadd.f32 %v93, %v169
      %v173 = vtanh.pop %v172
      %v174 = vmul.f32 %v173, %v79
      %175 = vadd.xlane.f32.xlu0 %v174
      %v176 = vpop.xlane.xlu0 %175
      %v178 = vlaneseq
      %v179 = vshrl.u32 %v178, 7
      %v180 = vsub.s32 0, %v179
      %v181 = vrot.slane %v81, %v180
      %v183 = vadd.f32 %v176, %v181
      %v184 = vxor.u32 %v183, 2147483648
      %v185 = vmul.f32 %v184, 1.442695
      %v186 = vpow.pop %v185
      %v187 = vadd.f32 %v186, 1.0
      %v188 = vrcp.pop %v187
      %v189 = vmul.f32 1.0, %v188
      %v190 = vadd.f32 %v82, %v189
      %v191 = vsub.f32 %v190, 1.0
      %v192 = vmax.f32 %v191, 0.0
      %v193 = vsub.f32 %v189, %v192
      %v194 = vadd.f32 %v193, 1.0
      %196 = vset.pattern.permute.xlu0 0
      %197 = vperm.xlu0 %196, %v194
      %v198 = vpop.permute.xlu0 %197
      %v200 = vmul.f32 %v198, %v173
      %vm201 = vcmask 7168
      %v202 = vsel %vm201, %v190, inf
      %203 = vmin.xlane.f32.xlu0 %v202
      %v204 = vpop.xlane.xlu0 %203
      %v205 = vrot.slane %v204, 4
      %v206 = vmin.f32 %v204, %v205
      %v207 = vrot.slane %v206, 2
      %v208 = vmin.f32 %v206, %v207
      %v209 = vrot.slane %v208, 1
      %v210 = vmin.f32 %v208, %v209
      %s211 = vtos %v210
      // While loop
      $region41: #{tpu_custom_call.1} parent=37 // loop_pre_header
        _
      $region42: #{tpu_custom_call.1} parent=37 // loop_header
        %s213 = sphi 1, %s434
        %s214 = sphi %s211, %s444
        %v215 = vphi %v173, %v407
        %v216 = vphi %v200, %v430
        %v217 = vphi %v190, %v431
        %v218 = vphi 1.0, %v433
        %v219 = vphi %v101, %v335
        %p220 = scmp.lt.s32.totalorder %s213, 100
        %p221 = scmp.lt.f32.partialorder %s214, 0.99
        %p222 = pnand %p220, %p221
        %p223 = pneg %p222
      $region43: #{tpu_custom_call.1} parent=37 // loop_header_branch
        %225 = sbr.rel (%p222) target = $region47
      $region44: #{tpu_custom_call.1} parent=37 // loop_body
        %vm226 = vcmp.lt.f32.partialorder %v217, 0.99
        %v227 = vsub.f32 0.0, %v217
        %v228 = vsel %vm226, %v227, %v219
        %229 = vmatprep.subr.mxu0 0.0
        %230 = vmatpush1.msra.mxu0 %v73
        %231 = vmatprep.subr.mxu0 0.0
        %232 = vmatpush1.msra.mxu0 %v72
        %233 = vmatprep.subr.mxu0 0.0
        %234 = vmatpush1.msra.mxu0 %v71
        %235 = vmatprep.subr.mxu0 0.0
        %236 = vmatpush1.msra.mxu0 %v70
        %237 = vmatprep.subr.mxu0 0.0
        %238 = vmatpush1.msra.mxu0 %v69
        %239 = vmatprep.subr.mxu0 0.0
        %240 = vmatpush1.msra.mxu0 %v68
        %241 = vmatprep.subr.mxu0 0.0
        %242 = vmatpush1.msra.mxu0 %v67
        %243 = vmatprep.subr.mxu0 0.0
        %244 = vmatpush1.msra.mxu0 %v66
        %245 = vmatprep.subr.mxu0 0.0
        %246 = vmatpush1.msra.mxu0 %v65
        %247 = vmatprep.subr.mxu0 0.0
        %248 = vmatpush1.msra.mxu0 %v64
        %249 = vmatprep.subr.mxu0 0.0
        %250 = vmatpush1.msra.mxu0 %v63
        %251 = vmatprep.subr.mxu0 0.0
        %252 = vmatpush1.msra.mxu0 %v62
        %253 = vmatprep.subr.mxu0 0.0
        %254 = vmatpush1.msra.mxu0 %v61
        %255 = vmatprep.subr.mxu0 0.0
        %256 = vmatpush1.msra.mxu0 %v60
        %257 = vmatprep.subr.mxu0 0.0
        %258 = vmatpush1.msra.mxu0 %v59
        %259 = vmatprep.subr.mxu0 0.0
        %260 = vmatpush1.msra.mxu0 %v58
        %261 = vmatprep.subr.mxu0 0.0
        %262 = vmatpush2.msra.mxu0 0.0
        %263 = vmatprep.subr.mxu0 0.0
        %264 = vmatpush2.msra.mxu0 0.0
        %265 = vmatprep.subr.mxu0 0.0
        %266 = vmatpush2.msra.mxu0 0.0
        %267 = vmatprep.subr.mxu0 0.0
        %268 = vmatpush2.msra.mxu0 0.0
        %269 = vmatprep.subr.mxu0 0.0
        %270 = vmatpush2.msra.mxu0 0.0
        %271 = vmatprep.subr.mxu0 0.0
        %272 = vmatpush2.msra.mxu0 0.0
        %273 = vmatprep.subr.mxu0 0.0
        %274 = vmatpush2.msra.mxu0 0.0
        %275 = vmatprep.subr.mxu0 0.0
        %276 = vmatpush2.msra.mxu0 0.0
        %277 = vmatprep.subr.mxu0 0.0
        %278 = vmatpush2.msra.mxu0 0.0
        %279 = vmatprep.subr.mxu0 0.0
        %280 = vmatpush2.msra.mxu0 0.0
        %281 = vmatprep.subr.mxu0 0.0
        %282 = vmatpush2.msra.mxu0 0.0
        %283 = vmatprep.subr.mxu0 0.0
        %284 = vmatpush2.msra.mxu0 0.0
        %285 = vmatprep.subr.mxu0 0.0
        %286 = vmatpush2.msra.mxu0 0.0
        %287 = vmatprep.subr.mxu0 0.0
        %288 = vmatpush2.msra.mxu0 0.0
        %289 = vmatprep.subr.mxu0 0.0
        %290 = vmatpush2.msra.mxu0 0.0
        %291 = vmatprep.subr.mxu0 0.0
        %292 = vmatpush2.msra.mxu0 0.0
        %293 = vmatprep.mubr.f32.mxu0 0.0
        %294 = vmatmul.mubr.f32.gmra.mxu0 %v215
        %v295 = vpop.f32.mrf.mxu0
        %v296 = vadd.f32 0.0, %v295
        %v297 = vpop.f32.mrf.mxu0
        %298 = vdwg.mxu0
        %v299 = vadd.f32 %v100, %v296
        %v300 = vtanh.pop %v299
        %v301 = vmul.f32 %v300, %v79
        %302 = vadd.xlane.f32.xlu0 %v301
        %v303 = vpop.xlane.xlu0 %302
        %v304 = vadd.f32 %v303, %v181
        %v305 = vxor.u32 %v304, 2147483648
        %v306 = vmul.f32 %v305, 1.442695
        %v307 = vpow.pop %v306
        %v308 = vadd.f32 %v307, 1.0
        %v309 = vrcp.pop %v308
        %v310 = vmul.f32 1.0, %v309
        %v311 = vadd.f32 %v217, %v310
        %v312 = vsub.f32 %v311, 1.0
        %v313 = vmax.f32 %v312, 0.0
        %v314 = vsub.f32 %v310, %v313
        %v315 = vadd.f32 %v314, 1.0
        %v316 = vsel %vm226, %v315, 0.0
        %318 = vset.pattern.permute.xlu0 0
        %319 = vperm.xlu0 %318, %v316
        %v320 = vpop.permute.xlu0 %319
        %v322 = vmul.f32 %v320, %v300
        %v323 = vadd.f32 %v216, %v322
        %v324 = vsel %vm226, %v311, %v217
        %v325 = vsel %vm226, 1.0, 0.0
        %v326 = vadd.f32 %v218, %v325
        %s327 = sadd.s32 %s213, 1
        %p328 = scmp.lt.s32.totalorder %s327, 100
        %vm329 = vcmp.lt.f32.partialorder %v324, 0.99
        %s330 = scalar_select %p328, 1, 0
        %v331 = vstv %s330
        %vm332 = vcmp.eq.s32.totalorder %v331, 1
        %vm333 = vmand %vm329, %vm332
        %v334 = vsub.f32 0.0, %v324
        %v335 = vsel %vm333, %v334, %v228
        %336 = vmatprep.subr.mxu0 0.0
        %337 = vmatpush1.msra.mxu0 %v73
        %338 = vmatprep.subr.mxu0 0.0
        %339 = vmatpush1.msra.mxu0 %v72
        %340 = vmatprep.subr.mxu0 0.0
        %341 = vmatpush1.msra.mxu0 %v71
        %342 = vmatprep.subr.mxu0 0.0
        %343 = vmatpush1.msra.mxu0 %v70
        %344 = vmatprep.subr.mxu0 0.0
        %345 = vmatpush1.msra.mxu0 %v69
        %346 = vmatprep.subr.mxu0 0.0
        %347 = vmatpush1.msra.mxu0 %v68
        %348 = vmatprep.subr.mxu0 0.0
        %349 = vmatpush1.msra.mxu0 %v67
        %350 = vmatprep.subr.mxu0 0.0
        %351 = vmatpush1.msra.mxu0 %v66
        %352 = vmatprep.subr.mxu0 0.0
        %353 = vmatpush1.msra.mxu0 %v65
        %354 = vmatprep.subr.mxu0 0.0
        %355 = vmatpush1.msra.mxu0 %v64
        %356 = vmatprep.subr.mxu0 0.0
        %357 = vmatpush1.msra.mxu0 %v63
        %358 = vmatprep.subr.mxu0 0.0
        %359 = vmatpush1.msra.mxu0 %v62
        %360 = vmatprep.subr.mxu0 0.0
        %361 = vmatpush1.msra.mxu0 %v61
        %362 = vmatprep.subr.mxu0 0.0
        %363 = vmatpush1.msra.mxu0 %v60
        %364 = vmatprep.subr.mxu0 0.0
        %365 = vmatpush1.msra.mxu0 %v59
        %366 = vmatprep.subr.mxu0 0.0
        %367 = vmatpush1.msra.mxu0 %v58
        %368 = vmatprep.subr.mxu0 0.0
        %369 = vmatpush2.msra.mxu0 0.0
        %370 = vmatprep.subr.mxu0 0.0
        %371 = vmatpush2.msra.mxu0 0.0
        %372 = vmatprep.subr.mxu0 0.0
        %373 = vmatpush2.msra.mxu0 0.0
        %374 = vmatprep.subr.mxu0 0.0
        %375 = vmatpush2.msra.mxu0 0.0
        %376 = vmatprep.subr.mxu0 0.0
        %377 = vmatpush2.msra.mxu0 0.0
        %378 = vmatprep.subr.mxu0 0.0
        %379 = vmatpush2.msra.mxu0 0.0
        %380 = vmatprep.subr.mxu0 0.0
        %381 = vmatpush2.msra.mxu0 0.0
        %382 = vmatprep.subr.mxu0 0.0
        %383 = vmatpush2.msra.mxu0 0.0
        %384 = vmatprep.subr.mxu0 0.0
        %385 = vmatpush2.msra.mxu0 0.0
        %386 = vmatprep.subr.mxu0 0.0
        %387 = vmatpush2.msra.mxu0 0.0
        %388 = vmatprep.subr.mxu0 0.0
        %389 = vmatpush2.msra.mxu0 0.0
        %390 = vmatprep.subr.mxu0 0.0
        %391 = vmatpush2.msra.mxu0 0.0
        %392 = vmatprep.subr.mxu0 0.0
        %393 = vmatpush2.msra.mxu0 0.0
        %394 = vmatprep.subr.mxu0 0.0
        %395 = vmatpush2.msra.mxu0 0.0
        %396 = vmatprep.subr.mxu0 0.0
        %397 = vmatpush2.msra.mxu0 0.0
        %398 = vmatprep.subr.mxu0 0.0
        %399 = vmatpush2.msra.mxu0 0.0
        %400 = vmatprep.mubr.f32.mxu0 0.0
        %401 = vmatmul.mubr.f32.gmra.mxu0 %v300
        %v402 = vpop.f32.mrf.mxu0
        %v403 = vadd.f32 0.0, %v402
        %v404 = vpop.f32.mrf.mxu0
        %405 = vdwg.mxu0
        %v406 = vadd.f32 %v100, %v403
        %v407 = vtanh.pop %v406
        %v408 = vmul.f32 %v407, %v79
        %409 = vadd.xlane.f32.xlu0 %v408
        %v410 = vpop.xlane.xlu0 %409
        %v411 = vadd.f32 %v410, %v181
        %v412 = vxor.u32 %v411, 2147483648
        %v413 = vmul.f32 %v412, 1.442695
        %v414 = vpow.pop %v413
        %v415 = vadd.f32 %v414, 1.0
        %v416 = vrcp.pop %v415
        %v417 = vmul.f32 1.0, %v416
        %v418 = vadd.f32 %v324, %v417
        %v419 = vsub.f32 %v418, 1.0
        %v420 = vmax.f32 %v419, 0.0
        %v421 = vsub.f32 %v417, %v420
        %v422 = vadd.f32 %v421, 1.0
        %v423 = vsel %vm333, %v422, 0.0
        %425 = vset.pattern.permute.xlu0 0
        %426 = vperm.xlu0 %425, %v423
        %v427 = vpop.permute.xlu0 %426
        %v429 = vmul.f32 %v427, %v407
        %v430 = vadd.f32 %v323, %v429
        %v431 = vsel %vm333, %v418, %v324
        %v432 = vsel %vm333, 1.0, 0.0
        %v433 = vadd.f32 %v326, %v432
        %s434 = sadd.s32 %s213, 2
        %v435 = vsel %vm201, %v431, inf
        %436 = vmin.xlane.f32.xlu0 %v435
        %v437 = vpop.xlane.xlu0 %436
        %v438 = vrot.slane %v437, 4
        %v439 = vmin.f32 %v437, %v438
        %v440 = vrot.slane %v439, 2
        %v441 = vmin.f32 %v439, %v440
        %v442 = vrot.slane %v441, 1
        %v443 = vmin.f32 %v441, %v442
        %s444 = vtos %v443
      $region45: #{tpu_custom_call.1} parent=37 // loop_footer
        _
      $region46: #{tpu_custom_call.1} parent=37 // loop_footer_branch
        %212 = sbr.rel target = $region42
      $region47: #{tpu_custom_call.1} parent=37 // loop_exit
        _
      %446 = vset.pattern.permute.xlu0 0
      %447 = vperm.xlu0 %446, %v218
      %v448 = vpop.permute.xlu0 %447
      %v450 = vrcp.pop %v448
      %v451 = vmul.f32 %v216, %v450
      %s452 = scalar_lea.vmem [#allocation8], %s91
      %453 = vst [vmem:[%s452] sm:$0xff] %v451
      %s454 = scalar_lea.vmem %s8, %s91
      %455 = vst.msk [vmem:[%s454] sm:$0xff] %vm201, %v218
      %v456 = vadd.f32 %v90, %v219
    $region38: #{tpu_custom_call.1} parent=1 // loop_footer
      %s88 = sadd.s32 1, %s84
    $region39: #{tpu_custom_call.1} parent=1 // loop_footer_branch
      %83 = sbr.rel target = $region35
    $region40: #{tpu_custom_call.1} parent=1 // loop_exit
      _
    %vm457 = vcmask 7168
    %458 = vst.msk [vmem:[%s7] sm:$0xff] %vm457, %v90
    // Predicated region
    $region48: #{tpu_custom_call.1} parent=1 // pred_check
      _
    $region49: #{tpu_custom_call.1} parent=1 // pred_check_branch
      %460 = sbr.rel (0) target = $region51
    $region50: #{tpu_custom_call.1} parent=1 // pred_region
      %s462 = ssub.s32 1024, 1024
      %463 = vsyncadd [#allocation5], %s462
      %s464 = sshll.u32 [#allocation8], 4
      %s465 = int_to_ptr.vmem [resolvable:$true] %s464
      %470 = dma.vmem_to_hbm [thread:$0]  %s465, 1024, %s6, [#allocation5], 128, 128, 8
    $region51: #{tpu_custom_call.1} parent=1 // pred_fallthru
      _
    // Predicated region
    $region52: #{tpu_custom_call.1} parent=1 // pred_check
      _
    $region53: #{tpu_custom_call.1} parent=1 // pred_check_branch
      %472 = sbr.rel (0) target = $region55
    $region54: #{tpu_custom_call.1} parent=1 // pred_region
      _
    $region55: #{tpu_custom_call.1} parent=1 // pred_fallthru
      _
    // Predicated region
    $region56: #{tpu_custom_call.1} parent=1 // pred_check
      _
    $region57: #{tpu_custom_call.1} parent=1 // pred_check_branch
      %474 = sbr.rel (0) target = $region59
    $region58: #{tpu_custom_call.1} parent=1 // pred_region
      _
    $region59: #{tpu_custom_call.1} parent=1 // pred_fallthru
      _
    // Predicated region
    $region60: #{tpu_custom_call.1} parent=1 // pred_check
      _
    $region61: #{tpu_custom_call.1} parent=1 // pred_check_branch
      %476 = sbr.rel (0) target = $region63
    $region62: #{tpu_custom_call.1} parent=1 // pred_region
      %477 = dma.done [#allocation5], 1024
    $region63: #{tpu_custom_call.1} parent=1 // pred_fallthru
      _
    // Predicated region
    $region64: #{tpu_custom_call.1} parent=1 // pred_check
      _
    $region65: #{tpu_custom_call.1} parent=1 // pred_check_branch
      %479 = sbr.rel (0) target = $region67
    $region66: #{tpu_custom_call.1} parent=1 // pred_region
      _
    $region67: #{tpu_custom_call.1} parent=1 // pred_fallthru
      _
    // Predicated region
    $region68: #{tpu_custom_call.1} parent=1 // pred_check
      _
    $region69: #{tpu_custom_call.1} parent=1 // pred_check_branch
      %481 = sbr.rel (0) target = $region71
    $region70: #{tpu_custom_call.1} parent=1 // pred_region
      _
    $region71: #{tpu_custom_call.1} parent=1 // pred_fallthru
      _
    %482 = vsyncpa [#allocation4], 1
    %483 = vsyncpa [#allocation7], 1
    %484 = vsyncpa [#allocation5], 1

</llo_original>
